<compile_context>
chip_gen: v7x
topology: tpu7x:2x2x1
jax: 0.10.0
libtpu: 0.0.40
codegen_flags: <defaults>
</compile_context>

<pallas_src>
import functools

import jax
import jax.numpy as jnp
from jax.experimental import pallas as pl
from jax.experimental.pallas import tpu as pltpu

_LANE = 128
_SUBLANE = 8
# Finite stand-in for -inf, applied only AFTER the f32 upcast (so it is safe
# for fp16/bf16 inputs): exp underflows to exactly 0, and 0 * _NEG == -0.0.
_NEG = float(jnp.finfo(jnp.float32).min)


def _lsce_hard_kernel(x_ref, tgt_ref, out_ref, m_ref, l_ref, swx_ref, *,
                      smoothing, confidence, inv_c, c_valid, tile_c, mask_cols):
    """target = class indices, block (TN, 1) int32; per-row loss output."""
    c = pl.program_id(1)

    @pl.when(c == 0)
    def _init():
        m_ref[...] = jnp.full_like(m_ref, _NEG)
        l_ref[...] = jnp.zeros_like(l_ref)
        swx_ref[...] = jnp.zeros_like(swx_ref)

    x = x_ref[...].astype(jnp.float32)                       # (TN, TC)
    tn, tc = x.shape
    gcol = jax.lax.broadcasted_iota(jnp.int32, (tn, tc), 1) + c * tile_c
    if mask_cols:                                            # partial last C chunk
        x = jnp.where(gcol < c_valid, x, _NEG)               # exp -> 0, weight -> 0

    # streaming logsumexp carry
    m_prev = m_ref[...]
    m_new = jnp.maximum(m_prev, jnp.max(x, axis=-1, keepdims=True))
    l_ref[...] = l_ref[...] * jnp.exp(m_prev - m_new) + jnp.sum(
        jnp.exp(x - m_new), axis=-1, keepdims=True)
    m_ref[...] = m_new

    # fused smoothing weights, single select: confidence+smoothing/C on the
    # target column, smoothing/C elsewhere (0 on padded columns).
    base = jnp.where(gcol < c_valid, inv_c, 0.0) if mask_cols else inv_c
    w = jnp.where(gcol == tgt_ref[...], confidence + inv_c, base)
    # sum(w * x) needs no running-max rescale (x itself is bounded)
    swx_ref[...] += jnp.sum(w * x, axis=-1, keepdims=True)

    @pl.when(c == pl.num_programs(1) - 1)
    def _finalize():
        # loss_row = -sum(w * logprobs) = sum(w)*lse - sum(w*x); sum(w)=conf+smooth
        lse = m_ref[...] + jnp.log(l_ref[...])
        out_ref[...] = (confidence + smoothing) * lse - swx_ref[...]


def _lsce_soft_kernel(x_ref, tgt_ref, out_ref, m_ref, l_ref, swx_ref, sw_ref, *,
                      smoothing, confidence, inv_c, c_valid, tile_c, mask_cols):
    """target = per-row distribution, block (TN, TC); per-row loss output."""
    c = pl.program_id(1)

    @pl.when(c == 0)
    def _init():
        m_ref[...] = jnp.full_like(m_ref, _NEG)
        l_ref[...] = jnp.zeros_like(l_ref)
        swx_ref[...] = jnp.zeros_like(swx_ref)
        sw_ref[...] = jnp.zeros_like(sw_ref)

    x = x_ref[...].astype(jnp.float32)                       # (TN, TC)
    tn, tc = x.shape
    if mask_cols:
        gcol = jax.lax.broadcasted_iota(jnp.int32, (tn, tc), 1) + c * tile_c
        x = jnp.where(gcol < c_valid, x, _NEG)

    m_prev = m_ref[...]
    m_new = jnp.maximum(m_prev, jnp.max(x, axis=-1, keepdims=True))
    l_ref[...] = l_ref[...] * jnp.exp(m_prev - m_new) + jnp.sum(
        jnp.exp(x - m_new), axis=-1, keepdims=True)
    m_ref[...] = m_new

    w = confidence * tgt_ref[...].astype(jnp.float32) + inv_c
    if mask_cols:
        w = jnp.where(gcol < c_valid, w, 0.0)
    swx_ref[...] += jnp.sum(w * x, axis=-1, keepdims=True)
    sw_ref[...] += jnp.sum(w, axis=-1, keepdims=True)        # soft tgt need not sum to 1

    @pl.when(c == pl.num_programs(1) - 1)
    def _finalize():
        lse = m_ref[...] + jnp.log(l_ref[...])
        out_ref[...] = sw_ref[...] * lse - swx_ref[...]


def _vmem_budget():
    """Generation-aware VMEM block budget + consistent scoped-VMEM limit."""
    try:
        cap = int(pltpu.get_tpu_info().vmem_capacity_bytes)
    except Exception:
        cap = 64 << 20                       # conservative (v7x-sized) fallback
    budget = (cap * 3) // 8                  # ~48 MiB on 128-MiB parts, ~24 MiB on v7x
    limit = min((cap * 3) // 4, budget + (16 << 20))
    return budget, limit


def _default_tiles(n, c, x_itemsize, tgt_itemsize, soft, budget):
    """Pick (tile_n, tile_c): stream vocab-scale C in 2048-lane chunks, and size
    N tiles so each grid step moves multi-MiB blocks within the VMEM budget."""
    tile_c = c if c <= 4096 else 2048        # block == full C is always legal
    # per-row VMEM bytes: double-buffered x (+ targets for soft) plus ~12 B of
    # f32 temporaries per element for the fused elementwise/reduction chain.
    per_row = tile_c * (2 * x_itemsize + 12)
    if soft:
        per_row += tile_c * (2 * tgt_itemsize + 4)
    tile_n = budget // max(per_row, 1)
    # Keep a single x block <= ~8 MiB (already at HBM roofline beyond that).
    tile_n = min(tile_n, (8 << 20) // max(tile_c * x_itemsize, 1), 4096)
    tile_n = max(_SUBLANE, (tile_n // _SUBLANE) * _SUBLANE)
    n_round = ((n + _SUBLANE - 1) // _SUBLANE) * _SUBLANE
    return min(tile_n, n_round), tile_c


def label_smoothing_cross_entropy(x, target, weightings=None, smoothing=0.1,
                                  weighting=False, tile_n=None, tile_c=None):
    """Forward of LabelSmoothingCrossEntropy. Returns a scalar loss."""
    assert smoothing < 1.0
    confidence = 1.0 - smoothing
    # TODO(synk): the weighting=True branch of the reference divides an [N, C]
    # tensor by an [N] sum without keepdim (broadcast only valid when C == N);
    # that ill-posed path is not reproduced here.
    assert not weighting, "weighting=True branch not implemented"

    n, c = x.shape
    hard = (target.ndim == 1)

    budget, vmem_limit = _vmem_budget()
    auto_tn, auto_tc = _default_tiles(n, c, jnp.dtype(x.dtype).itemsize,
                                      jnp.dtype(target.dtype).itemsize,
                                      soft=not hard, budget=budget)
    tile_n = auto_tn if tile_n is None else int(tile_n)
    tile_c = auto_tc if tile_c is None else int(tile_c)
    assert tile_n % _SUBLANE == 0
    assert tile_c == c or tile_c % _LANE == 0

    grid_n = pl.cdiv(n, tile_n)
    grid_c = pl.cdiv(c, tile_c)
    mask_cols = (tile_c != c) and (c % tile_c != 0)

    common = dict(smoothing=float(smoothing), confidence=float(confidence),
                  inv_c=float(smoothing) / c, c_valid=c, tile_c=tile_c,
                  mask_cols=mask_cols)

    x_spec = pl.BlockSpec((tile_n, tile_c), lambda i, j: (i, j))
    if hard:
        tgt = target.astype(jnp.int32).reshape(n, 1)
        tgt_spec = pl.BlockSpec((tile_n, 1), lambda i, j: (i, 0))
        kernel = functools.partial(_lsce_hard_kernel, **common)
        scratch = [pltpu.VMEM((tile_n, 1), jnp.float32)] * 3
    else:
        assert target.ndim == 2
        tgt = target
        tgt_spec = pl.BlockSpec((tile_n, tile_c), lambda i, j: (i, j))
        kernel = functools.partial(_lsce_soft_kernel, **common)
        scratch = [pltpu.VMEM((tile_n, 1), jnp.float32)] * 4

    # TODO(synk): if xprof still shows exposed input DMA on v7x after the large
    # tiles, set pipeline_mode=pl.Buffered(3) on x_spec.
    per_row = pl.pallas_call(
        kernel,
        out_shape=jax.ShapeDtypeStruct((n, 1), jnp.float32),
        grid=(grid_n, grid_c),
        in_specs=[x_spec, tgt_spec],
        out_specs=pl.BlockSpec((tile_n, 1), lambda i, j: (i, 0)),
        scratch_shapes=scratch,
        compiler_params=pltpu.CompilerParams(
            dimension_semantics=("parallel", "arbitrary"),
            vmem_limit_bytes=int(vmem_limit)),
    )(x, tgt)
    # Per-row f32 losses; mean via XLA's tree reduction (better precision than a
    # serial scalar accumulator, and keeps the row axis "parallel" for megacore).
    return jnp.mean(per_row)


def _reference(x, target, smoothing=0.1):
    """Plain-JAX reference mirroring the PyTorch module (weighting=False)."""
    confidence = 1.0 - smoothing
    logprobs = jax.nn.log_softmax(x.astype(jnp.float32), axis=-1)
    smooth_loss = -jnp.mean(logprobs, axis=-1)
    if target.ndim == 1:
        nll_loss = -jnp.take_along_axis(logprobs, target[:, None], axis=-1)[:, 0]
    else:
        nll_loss = -jnp.sum(target * logprobs, axis=-1)
    return jnp.mean(confidence * nll_loss + smoothing * smooth_loss)


if __name__ == "__main__":
    key = jax.random.PRNGKey(0)
    kx, kt, kw, kx2, kt2, kx3, kt3 = jax.random.split(key, 7)

    # 1) hard-target path (target.dim() == 1), single-tile grid
    N, C = 8, 32
    x = jax.random.normal(kx, (N, C), dtype=jnp.float32)
    target = jax.random.randint(kt, (N,), 0, C, dtype=jnp.int32)
    weightings = jax.random.uniform(kw, (C,), dtype=jnp.float32)  # unused (weighting=False)

    loss = jax.block_until_ready(label_smoothing_cross_entropy(x, target, weightings))
    ref = _reference(x, target)
    assert jnp.allclose(loss, ref, atol=1e-5, rtol=1e-5), (loss, ref)

    # 2) soft-target path (target.dim() == 2)
    soft_target = jax.nn.one_hot(target, C, dtype=jnp.float32)
    loss2 = jax.block_until_ready(label_smoothing_cross_entropy(x, soft_target, weightings))
    ref2 = _reference(x, soft_target)
    assert jnp.allclose(loss2, ref2, atol=1e-5, rtol=1e-5), (loss2, ref2)

    # 3) multi-row-tile grid with a partial last row block (N=20, tile_n=8 -> 3 tiles)
    N2, C2 = 20, 32
    x2 = jax.random.normal(kx2, (N2, C2), dtype=jnp.float32)
    target2 = jax.random.randint(kt2, (N2,), 0, C2, dtype=jnp.int32)
    loss3 = jax.block_until_ready(
        label_smoothing_cross_entropy(x2, target2, None, tile_n=8))
    ref3 = _reference(x2, target2)
    assert jnp.allclose(loss3, ref3, atol=1e-5, rtol=1e-5), (loss3, ref3)

    # 4) streaming class axis with a partial last C chunk (C=200, tile_c=128 -> 2 chunks)
    N3, C3 = 16, 200
    x3 = jax.random.normal(kx3, (N3, C3), dtype=jnp.float32)
    target3 = jax.random.randint(kt3, (N3,), 0, C3, dtype=jnp.int32)
    loss4 = jax.block_until_ready(
        label_smoothing_cross_entropy(x3, target3, None, tile_n=8, tile_c=128))
    ref4 = _reference(x3, target3)
    assert jnp.allclose(loss4, ref4, atol=1e-5, rtol=1e-5), (loss4, ref4)

    # 5) soft targets + streaming class axis
    soft3 = jax.nn.one_hot(target3, C3, dtype=jnp.float32) * 0.9 + 0.1 / C3
    loss5 = jax.block_until_ready(
        label_smoothing_cross_entropy(x3, soft3, None, tile_n=8, tile_c=128))
    ref5 = _reference(x3, soft3)
    assert jnp.allclose(loss5, ref5, atol=1e-5, rtol=1e-5), (loss5, ref5)

    print("KERNEL_OK")
</pallas_src>

<mosaic_0001>
module attributes {stable_mosaic.version = 11 : i64} {
  func.func @_lsce_hard_kernel(%arg0: i32, %arg1: i32, %arg2: memref<8x32xf32, #tpu.memory_space<vmem>>, %arg3: memref<8x1xi32, #tpu.memory_space<vmem>>, %arg4: memref<8x1xf32, #tpu.memory_space<vmem>>, %arg5: memref<8x1xf32, #tpu.memory_space<vmem>>, %arg6: memref<8x1xf32, #tpu.memory_space<vmem>>, %arg7: memref<8x1xf32, #tpu.memory_space<vmem>>) attributes {dimension_semantics = [#tpu.dimension_semantics<parallel>, #tpu.dimension_semantics<arbitrary>], iteration_bounds = array<i64: 1, 1>, scalar_prefetch = 0 : i64, scratch_operands = 3 : i64, tpu.core_type = #tpu.core_type<tc>, window_params = [{transform_indices = @transform_0, window_bounds = array<i64: 8, 32>}, {transform_indices = @transform_1, window_bounds = array<i64: 8, 1>}, {transform_indices = @transform_2, window_bounds = array<i64: 8, 1>}]} {
    %c0_i32 = arith.constant 0 : i32
    %0 = arith.cmpi eq, %arg1, %c0_i32 : i32
    %1 = arith.extui %0 : i1 to i32
    %c0_i32_0 = arith.constant 0 : i32
    %2 = arith.cmpi ne, %1, %c0_i32_0 : i32
    scf.if %2 {
      %cst_22 = arith.constant -3.40282347E+38 : f32
      %39 = vector.broadcast %cst_22 : f32 to vector<8x1xf32>
      %c0_23 = arith.constant 0 : index
      %c0_24 = arith.constant 0 : index
      %40 = vector.load %arg5[%c0_23, %c0_24] : memref<8x1xf32, #tpu.memory_space<vmem>>, vector<8x1xf32>
      tpu.vector_store %arg5[%c0_23, %c0_24], %39 {strides = array<i32>} : memref<8x1xf32, #tpu.memory_space<vmem>>, vector<8x1xf32>,
      %cst_25 = arith.constant 0.000000e+00 : f32
      %41 = vector.broadcast %cst_25 : f32 to vector<8x1xf32>
      %c0_26 = arith.constant 0 : index
      %c0_27 = arith.constant 0 : index
      %42 = vector.load %arg6[%c0_26, %c0_27] : memref<8x1xf32, #tpu.memory_space<vmem>>, vector<8x1xf32>
      tpu.vector_store %arg6[%c0_26, %c0_27], %41 {strides = array<i32>} : memref<8x1xf32, #tpu.memory_space<vmem>>, vector<8x1xf32>,
      %cst_28 = arith.constant 0.000000e+00 : f32
      %43 = vector.broadcast %cst_28 : f32 to vector<8x1xf32>
      %c0_29 = arith.constant 0 : index
      %c0_30 = arith.constant 0 : index
      %44 = vector.load %arg7[%c0_29, %c0_30] : memref<8x1xf32, #tpu.memory_space<vmem>>, vector<8x1xf32>
      tpu.vector_store %arg7[%c0_29, %c0_30], %43 {strides = array<i32>} : memref<8x1xf32, #tpu.memory_space<vmem>>, vector<8x1xf32>,
    } else {
    }
    %c0 = arith.constant 0 : index
    %c0_1 = arith.constant 0 : index
    %3 = vector.load %arg2[%c0, %c0_1] : memref<8x32xf32, #tpu.memory_space<vmem>>, vector<8x32xf32>
    %4 = tpu.iota {dimensions = array<i32: 1>} : vector<8x32xi32>
    %c32_i32 = arith.constant 32 : i32
    %5 = arith.muli %arg1, %c32_i32 : i32
    %6 = vector.broadcast %5 : i32 to vector<8x32xi32>
    %7 = arith.addi %4, %6 : vector<8x32xi32>
    %c0_2 = arith.constant 0 : index
    %c0_3 = arith.constant 0 : index
    %8 = vector.load %arg5[%c0_2, %c0_3] : memref<8x1xf32, #tpu.memory_space<vmem>>, vector<8x1xf32>
    %cst = arith.constant dense<0xFF800000> : vector<8xf32>
    %9 = vector.multi_reduction <maximumf>, %3, %cst [1] : vector<8x32xf32> to vector<8xf32>
    %10 = vector.shape_cast %9 : vector<8xf32> to vector<8x1xf32>
    %11 = arith.maximumf %8, %10 : vector<8x1xf32>
    %c0_4 = arith.constant 0 : index
    %c0_5 = arith.constant 0 : index
    %12 = vector.load %arg6[%c0_4, %c0_5] : memref<8x1xf32, #tpu.memory_space<vmem>>, vector<8x1xf32>
    %13 = arith.subf %8, %11 : vector<8x1xf32>
    %14 = math.exp %13 : vector<8x1xf32>
    %15 = arith.mulf %12, %14 : vector<8x1xf32>
    %16 = vector.broadcast %11 : vector<8x1xf32> to vector<8x32xf32>
    %17 = arith.subf %3, %16 : vector<8x32xf32>
    %18 = math.exp %17 : vector<8x32xf32>
    %cst_6 = arith.constant dense<0.000000e+00> : vector<8xf32>
    %19 = vector.multi_reduction <add>, %18, %cst_6 [1] : vector<8x32xf32> to vector<8xf32>
    %20 = vector.shape_cast %19 : vector<8xf32> to vector<8x1xf32>
    %21 = arith.addf %15, %20 : vector<8x1xf32>
    %c0_7 = arith.constant 0 : index
    %c0_8 = arith.constant 0 : index
    %22 = vector.load %arg6[%c0_7, %c0_8] : memref<8x1xf32, #tpu.memory_space<vmem>>, vector<8x1xf32>
    tpu.vector_store %arg6[%c0_7, %c0_8], %21 {strides = array<i32>} : memref<8x1xf32, #tpu.memory_space<vmem>>, vector<8x1xf32>,
    %c0_9 = arith.constant 0 : index
    %c0_10 = arith.constant 0 : index
    %23 = vector.load %arg5[%c0_9, %c0_10] : memref<8x1xf32, #tpu.memory_space<vmem>>, vector<8x1xf32>
    tpu.vector_store %arg5[%c0_9, %c0_10], %11 {strides = array<i32>} : memref<8x1xf32, #tpu.memory_space<vmem>>, vector<8x1xf32>,
    %c0_11 = arith.constant 0 : index
    %c0_12 = arith.constant 0 : index
    %24 = vector.load %arg3[%c0_11, %c0_12] : memref<8x1xi32, #tpu.memory_space<vmem>>, vector<8x1xi32>
    %25 = vector.broadcast %24 : vector<8x1xi32> to vector<8x32xi32>
    %26 = arith.cmpi eq, %7, %25 : vector<8x32xi32>
    %cst_13 = arith.constant 0.903124988 : f32
    %cst_14 = arith.constant 3.125000e-03 : f32
    %27 = vector.broadcast %cst_13 : f32 to vector<8x32xf32>
    %28 = vector.broadcast %cst_14 : f32 to vector<8x32xf32>
    %29 = arith.select %26, %27, %28 : vector<8x32xi1>, vector<8x32xf32>
    %c0_15 = arith.constant 0 : index
    %c0_16 = arith.constant 0 : index
    %30 = vector.load %arg7[%c0_15, %c0_16] : memref<8x1xf32, #tpu.memory_space<vmem>>, vector<8x1xf32>
    %31 = arith.mulf %29, %3 : vector<8x32xf32>
    %cst_17 = arith.constant dense<0.000000e+00> : vector<8xf32>
    %32 = vector.multi_reduction <add>, %31, %cst_17 [1] : vector<8x32xf32> to vector<8xf32>
    %33 = vector.shape_cast %32 : vector<8xf32> to vector<8x1xf32>
    %34 = arith.addf %30, %33 : vector<8x1xf32>
    %c0_18 = arith.constant 0 : index
    %c0_19 = arith.constant 0 : index
    %35 = vector.load %arg7[%c0_18, %c0_19] : memref<8x1xf32, #tpu.memory_space<vmem>>, vector<8x1xf32>
    tpu.vector_store %arg7[%c0_18, %c0_19], %34 {strides = array<i32>} : memref<8x1xf32, #tpu.memory_space<vmem>>, vector<8x1xf32>,
    %c0_i32_20 = arith.constant 0 : i32
    %36 = arith.cmpi eq, %arg1, %c0_i32_20 : i32
    %37 = arith.extui %36 : i1 to i32
    %c0_i32_21 = arith.constant 0 : i32
    %38 = arith.cmpi ne, %37, %c0_i32_21 : i32
    scf.if %38 {
      %c0_22 = arith.constant 0 : index
      %c0_23 = arith.constant 0 : index
      %39 = vector.load %arg5[%c0_22, %c0_23] : memref<8x1xf32, #tpu.memory_space<vmem>>, vector<8x1xf32>
      %c0_24 = arith.constant 0 : index
      %c0_25 = arith.constant 0 : index
      %40 = vector.load %arg6[%c0_24, %c0_25] : memref<8x1xf32, #tpu.memory_space<vmem>>, vector<8x1xf32>
      %41 = math.log %40 : vector<8x1xf32>
      %42 = arith.addf %39, %41 : vector<8x1xf32>
      %cst_26 = arith.constant 1.000000e+00 : f32
      %43 = vector.broadcast %cst_26 : f32 to vector<8x1xf32>
      %44 = arith.mulf %43, %42 : vector<8x1xf32>
      %c0_27 = arith.constant 0 : index
      %c0_28 = arith.constant 0 : index
      %45 = vector.load %arg7[%c0_27, %c0_28] : memref<8x1xf32, #tpu.memory_space<vmem>>, vector<8x1xf32>
      %46 = arith.subf %44, %45 : vector<8x1xf32>
      %c0_29 = arith.constant 0 : index
      %c0_30 = arith.constant 0 : index
      %47 = vector.load %arg4[%c0_29, %c0_30] : memref<8x1xf32, #tpu.memory_space<vmem>>, vector<8x1xf32>
      tpu.vector_store %arg4[%c0_29, %c0_30], %46 {strides = array<i32>} : memref<8x1xf32, #tpu.memory_space<vmem>>, vector<8x1xf32>,
    } else {
    }
    return
  }
  func.func @transform_0(%arg0: i32, %arg1: i32) -> (i32, i32) {
    %c0_i32 = arith.constant 0 : i32
    return %arg0, %arg1 : i32, i32
  }
  func.func @transform_1(%arg0: i32, %arg1: i32) -> (i32, i32) {
    %c0_i32 = arith.constant 0 : i32
    %c0_i32_0 = arith.constant 0 : i32
    return %arg0, %c0_i32 : i32, i32
  }
  func.func @transform_2(%arg0: i32, %arg1: i32) -> (i32, i32) {
    %c0_i32 = arith.constant 0 : i32
    %c0_i32_0 = arith.constant 0 : i32
    return %arg0, %c0_i32 : i32, i32
  }
}

</mosaic_0001>

<llo_original>
// kernel: tpu_custom_call.1
$region0: #{tpu_custom_call.1}
  #allocation0 [shape = 'u32[]', space=smem, size = 0x4, offset = 0x4, fixed_abs, tag = 'smem constant byte address 0x4 - core index']
  #allocation1 [shape = 'u32[144,128]{1,0:T(1,128)}', space=vmem, size = 0x12000, scoped, tag = 'internal scratch']
  #allocation2 [shape = 'f32[8,1]{1,0:T(8,128)}', space=vmem, size = 0x1000, scoped, tag = 'scratch operand']
  #allocation3 [shape = 'f32[8,1]{1,0:T(8,128)}', space=vmem, size = 0x1000, scoped, tag = 'scratch operand']
  #allocation4 [shape = 'f32[8,1]{1,0:T(8,128)}', space=vmem, size = 0x1000, scoped, tag = 'scratch operand']
  %s0 = inlined_call_operand.vmem [shape: f32[8,32], index: 0, kind: input, shape index: {}]
  %s1 = inlined_call_operand.vmem [shape: s32[8,1], index: 1, kind: input, shape index: {}]
  %s2 = inlined_call_operand.vmem [shape: f32[8,1], index: 2, kind: output, shape index: {}]
  %s3 = sld [smem:[#allocation0]]
  $region26: #{tpu_custom_call.1} parent=0
    _
  %s5 = ssub.s32 1, %s3
  %s6 = scalar_select 0, %s5, %s3
  // Predicated region
  $region2: #{tpu_custom_call.1} parent=0 // pred_check
    _
  $region3: #{tpu_custom_call.1} parent=0 // pred_check_branch
    %8 = sbr.rel (0) target = $region5
  $region4: #{tpu_custom_call.1} parent=0 // pred_region
    _
  $region5: #{tpu_custom_call.1} parent=0 // pred_fallthru
    _
  // Predicated region
  $region6: #{tpu_custom_call.1} parent=0 // pred_check
    _
  $region7: #{tpu_custom_call.1} parent=0 // pred_check_branch
    %10 = sbr.rel (0) target = $region9
  $region8: #{tpu_custom_call.1} parent=0 // pred_region
    _
  $region9: #{tpu_custom_call.1} parent=0 // pred_fallthru
    _
  %p11 = scmp.eq.s32.totalorder 0, 0
  // Predicated region
  $region10: #{tpu_custom_call.1} parent=0 // pred_check
    %p12 = pneg %p11
  $region11: #{tpu_custom_call.1} parent=0 // pred_check_branch
    %14 = sbr.rel (%p12) target = $region13
  $region12: #{tpu_custom_call.1} parent=0 // pred_region
    %vm15 = vcmask 7168
    %16 = vst.msk [vmem:[#allocation2] sm:$0xff] %vm15, -3.4028235e+38
    %17 = vst.msk [vmem:[#allocation3] sm:$0xff] %vm15, 0.0
    %18 = vst.msk [vmem:[#allocation4] sm:$0xff] %vm15, 0.0
  $region13: #{tpu_custom_call.1} parent=0 // pred_fallthru
    _
  %v19 = vld [vmem:[%s0] sm:$0xff]
  %v20 = vlaneseq
  %v21 = vand.u32 %v20, 127
  %s22 = smul.u32 0, 32
  %v23 = vstv %s22
  %v24 = vadd.s32 %v21, %v23
  %v25 = vld [vmem:[#allocation2] sm:$0xff]
  %vm26 = vcmask 261120
  %v27 = vsel %vm26, %v19, -inf
  %28 = vmax.xlane.f32.xlu0 %v27
  %v29 = vpop.xlane.xlu0 %28
  %v30 = vmax.f32 %v25, %v29
  %v31 = vld [vmem:[#allocation3] sm:$0xff]
  %v32 = vsub.f32 %v25, %v30
  %v33 = vmul.f32 %v32, 1.442695
  %v34 = vpow.pop %v33
  %v35 = vmul.f32 %v31, %v34
  %37 = vset.pattern.permute.xlu0 0
  %38 = vperm.xlu0 %37, %v30
  %v39 = vpop.permute.xlu0 %38
  %v41 = vsub.f32 %v19, %v39
  %v42 = vmul.f32 %v41, 1.442695
  %v43 = vpow.pop %v42
  %v44 = vsel %vm26, %v43, 0.0
  %45 = vadd.xlane.f32.xlu0 %v44
  %v46 = vpop.xlane.xlu0 %45
  %v47 = vadd.f32 %v35, %v46
  %vm48 = vcmask 7168
  %49 = vst.msk [vmem:[#allocation3] sm:$0xff] %vm48, %v47
  %50 = vst.msk [vmem:[#allocation2] sm:$0xff] %vm48, %v30
  %v51 = vld [vmem:[%s1] sm:$0xff]
  %52 = vset.pattern.permute.xlu0 0
  %53 = vperm.xlu0 %52, %v51
  %v54 = vpop.permute.xlu0 %53
  %vm55 = vcmp.eq.s32.totalorder %v24, %v54
  %v56 = vsel %vm55, 0.903125, 0.003125
  %v57 = vld [vmem:[#allocation4] sm:$0xff]
  %v58 = vmul.f32 %v56, %v19
  %v59 = vsel %vm26, %v58, 0.0
  %60 = vadd.xlane.f32.xlu0 %v59
  %v61 = vpop.xlane.xlu0 %60
  %v62 = vadd.f32 %v57, %v61
  %63 = vst.msk [vmem:[#allocation4] sm:$0xff] %vm48, %v62
  // Predicated region
  $region14: #{tpu_custom_call.1} parent=0 // pred_check
    %p64 = pneg %p11
  $region15: #{tpu_custom_call.1} parent=0 // pred_check_branch
    %66 = sbr.rel (%p64) target = $region17
  $region16: #{tpu_custom_call.1} parent=0 // pred_region
    %v67 = vld [vmem:[#allocation2] sm:$0xff]
    %v68 = vld [vmem:[#allocation3] sm:$0xff]
    %v69 = vlog2.pop %v68
    %v70 = vmul.f32 %v69, 0.6931472
    %v71 = vadd.f32 %v67, %v70
    %v72 = vld [vmem:[#allocation4] sm:$0xff]
    %v73 = vsub.f32 %v71, %v72
    %74 = vst.msk [vmem:[%s2] sm:$0xff] %vm48, %v73
  $region17: #{tpu_custom_call.1} parent=0 // pred_fallthru
    _
  // Predicated region
  $region18: #{tpu_custom_call.1} parent=0 // pred_check
    _
  $region19: #{tpu_custom_call.1} parent=0 // pred_check_branch
    %76 = sbr.rel (0) target = $region21
  $region20: #{tpu_custom_call.1} parent=0 // pred_region
    _
  $region21: #{tpu_custom_call.1} parent=0 // pred_fallthru
    _
  // Predicated region
  $region22: #{tpu_custom_call.1} parent=0 // pred_check
    _
  $region23: #{tpu_custom_call.1} parent=0 // pred_check_branch
    %78 = sbr.rel (0) target = $region25
  $region24: #{tpu_custom_call.1} parent=0 // pred_region
    _
  $region25: #{tpu_custom_call.1} parent=0 // pred_fallthru
    _

</llo_original>
